<compile_context>
chip_gen: v5e
topology: v5e:2x2
jax: 0.10.0
libtpu: 0.0.40
codegen_flags: <defaults>
</compile_context>

<pallas_src>
import functools
import math

import jax
import jax.numpy as jnp
from jax import lax
from jax.experimental import pallas as pl
from jax.experimental.pallas import tpu as pltpu

_INV_SQRT2 = 1.0 / math.sqrt(2.0)

# im2col tap order: the four 2x2-pool taps first (channel groups padded to 8 sublanes
# so the in-kernel pooling slices are aligned), then the remaining five conv taps.
_POOL_TAPS = ((1, 1), (1, 2), (2, 1), (2, 2))
_REST_TAPS = ((0, 0), (0, 1), (0, 2), (1, 0), (2, 0))


def _round_up(x, m):
    return ((x + m - 1) // m) * m


def _gelu_exact(x):
    # nn.GELU() default (erf-based); math kept in f32 (v5e has no bf16 VPU/EUP).
    return 0.5 * x * (1.0 + lax.erf(x * _INV_SQRT2))


def _dsb_kernel(nin, g, nconv, nout, patch_ref, w_ref, bn_ref, o_ref):
    pr = patch_ref[0]                                                   # (K, TP)

    # conv3x3 (stride 2, pad 1, no bias) with BN1 scale folded into w; BN1 bias; GELU.
    conv = jnp.dot(w_ref[...], pr, preferred_element_type=jnp.float32)  # (nConv, TP)
    y1 = _gelu_exact(conv + bn_ref[0, :nconv, :])

    # MaxPool2d(2,2) + AvgPool2d(2,2) of `input`: the 2x2 window taps are the first
    # nIn channels of the four leading (8-aligned) im2col tap groups.
    # NOTE: pooled branch is computed from the bf16 patches (tiny drift vs f32 torch).
    t0 = pr[0 * g:0 * g + nin, :].astype(jnp.float32)
    t1 = pr[1 * g:1 * g + nin, :].astype(jnp.float32)
    t2 = pr[2 * g:2 * g + nin, :].astype(jnp.float32)
    t3 = pr[3 * g:3 * g + nin, :].astype(jnp.float32)
    pooled = (jnp.maximum(jnp.maximum(t0, t1), jnp.maximum(t2, t3))
              + (t0 + t1 + t2 + t3) * 0.25)                             # (nIn, TP)

    # Final BN (folded) + GELU applied once on the full (nOut, TP) tile; single
    # unmasked lane-dense store.
    y = jnp.concatenate([y1, pooled], axis=0)                           # (nOut, TP)
    out = _gelu_exact(y * bn_ref[1, :nout, :] + bn_ref[2, :nout, :])
    o_ref[0, :, :] = out.astype(o_ref.dtype)


def input_injection(image_nchw, target_h):
    # InputInjection: repeated avg_pool2d(3,p1,s2) + max_pool2d(3,p1,s2) until the
    # spatial size matches the target.  Shape-dependent Python loop -> plain-JAX glue.
    x = image_nchw
    while x.shape[2] != target_h:
        pads = [(0, 0), (0, 0), (1, 1), (1, 1)]
        avg = lax.reduce_window(x, 0.0, lax.add, (1, 1, 3, 3), (1, 1, 2, 2), pads) / 9.0
        mx = lax.reduce_window(x, -jnp.inf, lax.max, (1, 1, 3, 3), (1, 1, 2, 2), pads)
        x = avg + mx
    return x


def _pick_tile(ppad, k, nout, in_item, out_item, n_batch,
               budget_bytes=20 * 1024 * 1024):
    cands = [ppad, 8192, 4096, 2048, 1024, 512, 256, 128]
    if n_batch == 1 and ppad >= 256:
        # keep >=2 spatial tiles so both v7x TensorCores get work
        cap = max(128, ppad // 2)
        cands = [c for c in cands if c <= cap]
    for cand in cands:
        if ppad % cand:
            continue
        if 2 * cand * (k * in_item + nout * out_item) <= budget_bytes:
            return cand
    return 128


def downsampling_block(input_nchw, image_nchw, w, s1, b1, s2, b2,
                       *, compute_dtype=jnp.bfloat16):
    """w: (nConv, nIn+3, 3, 3) conv weight; s*/b*: folded BatchNorm scale/bias."""
    N, nIn, H, W = input_nchw.shape
    nConv = w.shape[0]
    nOut = s2.shape[0]
    assert nIn < nOut  # TODO(synk): nIn >= nOut branch (no pooled concat) not implemented
    assert nOut == nConv + nIn
    assert H % 2 == 0 and W % 2 == 0
    HO, WO = H // 2, W // 2
    P = HO * WO
    Ppad = _round_up(P, 128)
    Cin = nIn + 3
    G = _round_up(Cin, 8)                 # aligned channel group for the pool taps
    K0 = 4 * G + 5 * Cin
    K = _round_up(K0, 8)
    Rp = _round_up(nOut, 8)

    in_item = jnp.dtype(compute_dtype).itemsize
    out_dtype = compute_dtype if compute_dtype == jnp.bfloat16 else jnp.float32
    out_item = jnp.dtype(out_dtype).itemsize

    # --- glue: InputInjection + channel concat, cast early to bf16, zero pad, im2col.
    bb = input_injection(image_nchw, H)                                 # (N, 3, H, W)
    x = jnp.concatenate([input_nchw, bb], axis=1).astype(compute_dtype)  # (N, Cin, H, W)
    x = jnp.pad(x, ((0, 0), (0, 0), (1, 1), (1, 1)))                    # (N, Cin, H+2, W+2)

    def tap(kh, kw):
        return x[:, :, kh:kh + H:2, kw:kw + W:2]                        # (N, Cin, HO, WO)

    groups = []
    for (kh, kw) in _POOL_TAPS:
        t = tap(kh, kw)
        if G > Cin:
            t = jnp.pad(t, ((0, 0), (0, G - Cin), (0, 0), (0, 0)))
        groups.append(t)
    for (kh, kw) in _REST_TAPS:
        groups.append(tap(kh, kw))
    patches = jnp.concatenate(groups, axis=1)                           # (N, K0, HO, WO)
    if K > K0:
        patches = jnp.pad(patches, ((0, 0), (0, K - K0), (0, 0), (0, 0)))
    patches = patches.reshape(N, K, P)
    if Ppad > P:
        patches = jnp.pad(patches, ((0, 0), (0, 0), (0, Ppad - P)))
    # TODO(synk): in-kernel im2col (raw slab + halo DMA) would remove this materialization.

    # --- glue: fold BN1 scale into the weight, same row order / padding as the patches.
    ws = (w * s1[:, None, None, None]).astype(jnp.float32)
    cols = []
    for (kh, kw) in _POOL_TAPS:
        c = ws[:, :, kh, kw]                                            # (nConv, Cin)
        if G > Cin:
            c = jnp.pad(c, ((0, 0), (0, G - Cin)))
        cols.append(c)
    for (kh, kw) in _REST_TAPS:
        cols.append(ws[:, :, kh, kw])
    w_mat = jnp.concatenate(cols, axis=1)                               # (nConv, K0)
    if K > K0:
        w_mat = jnp.pad(w_mat, ((0, 0), (0, K - K0)))
    w_mat = w_mat.astype(compute_dtype)

    # --- single stacked per-channel parameter operand: [b1 | s2 | b2]
    bn = jnp.zeros((3, Rp, 1), jnp.float32)
    bn = bn.at[0, :nConv, 0].set(b1.astype(jnp.float32))
    bn = bn.at[1, :nOut, 0].set(s2.astype(jnp.float32))
    bn = bn.at[2, :nOut, 0].set(b2.astype(jnp.float32))

    # --- tiling and VMEM budget (v7x: 64 MiB/TC physical; stay well under)
    TP = _pick_tile(Ppad, K, nOut, in_item, out_item, N)
    block_bytes = 2 * TP * (K * in_item + nOut * out_item)
    const_bytes = 2 * (nConv * K * in_item + 3 * Rp * 128 * 4)
    vmem_limit = int(min(max(block_bytes + const_bytes + (8 << 20), 16 << 20), 48 << 20))

    bytes_accessed = (patches.size * in_item + w_mat.size * in_item
                      + bn.size * 4 + N * nOut * Ppad * out_item)
    cost = pl.CostEstimate(flops=2 * N * Ppad * K * nConv,
                           transcendentals=N * Ppad * (nConv + nOut),
                           bytes_accessed=bytes_accessed)

    kernel = functools.partial(_dsb_kernel, nIn, G, nConv, nOut)

    out_flat = pl.pallas_call(
        kernel,
        out_shape=jax.ShapeDtypeStruct((N, nOut, Ppad), out_dtype),
        grid_spec=pltpu.PrefetchScalarGridSpec(
            num_scalar_prefetch=0,
            grid=(N, Ppad // TP),
            in_specs=[
                pl.BlockSpec((1, K, TP), lambda n, p: (n, 0, p)),
                pl.BlockSpec((nConv, K), lambda n, p: (0, 0)),
                pl.BlockSpec((3, Rp, 1), lambda n, p: (0, 0, 0)),
            ],
            out_specs=pl.BlockSpec((1, nOut, TP), lambda n, p: (n, 0, p)),
        ),
        compiler_params=pltpu.CompilerParams(
            dimension_semantics=("parallel", "parallel"),
            vmem_limit_bytes=vmem_limit,
        ),
        cost_estimate=cost,
    )(patches, w_mat, bn)

    # kernel output is channel-major: crop the lane padding (no-op when Ppad == P),
    # then a plain reshape gives NCHW.
    return out_flat[:, :, :P].reshape(N, nOut, HO, WO)


def reference(input_nchw, image_nchw, w, s1, b1, s2, b2):
    """Pure-JAX f32 reference mirroring the PyTorch forward (inference-mode BN)."""
    H = input_nchw.shape[2]
    bb = input_injection(image_nchw, H)
    x = jnp.concatenate([input_nchw, bb], axis=1)
    conv = lax.conv_general_dilated(
        x, w, window_strides=(2, 2), padding=((1, 1), (1, 1)),
        dimension_numbers=("NCHW", "OIHW", "NCHW"))
    y1 = _gelu_exact(conv * s1[None, :, None, None] + b1[None, :, None, None])
    mx = lax.reduce_window(input_nchw, -jnp.inf, lax.max, (1, 1, 2, 2), (1, 1, 2, 2), "VALID")
    av = lax.reduce_window(input_nchw, 0.0, lax.add, (1, 1, 2, 2), (1, 1, 2, 2), "VALID") / 4.0
    out = jnp.concatenate([y1, mx + av], axis=1)
    return _gelu_exact(out * s2[None, :, None, None] + b2[None, :, None, None])


if __name__ == "__main__":
    nIn, nOut = 4, 8
    N, H, W = 2, 16, 16
    nConv = nOut - nIn
    Cin = nIn + 3
    eps = 1e-5

    keys = jax.random.split(jax.random.PRNGKey(0), 12)
    inp = jax.random.normal(keys[0], (N, nIn, H, W), jnp.float32)
    # image is 2x the spatial size -> InputInjection does one avg+max pooling step
    img = jax.random.normal(keys[1], (N, 3, 2 * H, 2 * W), jnp.float32)

    # Conv2d(nIn+3, nConv, 3, stride=2, padding=1, bias=False) weight
    bound = 1.0 / math.sqrt(Cin * 9)
    w = jax.random.uniform(keys[2], (nConv, Cin, 3, 3), jnp.float32, -bound, bound)

    # BatchNorm2d(nConv) of the CBR block (inference-mode, folded)
    g1 = jax.random.uniform(keys[3], (nConv,), jnp.float32, 0.5, 1.5)
    be1 = 0.1 * jax.random.normal(keys[4], (nConv,), jnp.float32)
    m1 = 0.1 * jax.random.normal(keys[5], (nConv,), jnp.float32)
    v1 = jax.random.uniform(keys[6], (nConv,), jnp.float32, 0.5, 1.5)
    s1 = g1 / jnp.sqrt(v1 + eps)
    b1 = be1 - m1 * s1

    # BatchNorm2d(nOut) of the final BR block (inference-mode, folded)
    g2 = jax.random.uniform(keys[7], (nOut,), jnp.float32, 0.5, 1.5)
    be2 = 0.1 * jax.random.normal(keys[8], (nOut,), jnp.float32)
    m2 = 0.1 * jax.random.normal(keys[9], (nOut,), jnp.float32)
    v2 = jax.random.uniform(keys[10], (nOut,), jnp.float32, 0.5, 1.5)
    s2 = g2 / jnp.sqrt(v2 + eps)
    b2 = be2 - m2 * s2

    ref = reference(inp, img, w, s1, b1, s2, b2)

    # performance path (bf16 MXU inputs, bf16 output) -> loosened tolerance
    out = downsampling_block(inp, img, w, s1, b1, s2, b2)
    out = jax.block_until_ready(out)
    assert out.shape == (N, nOut, H // 2, W // 2), out.shape
    assert jnp.allclose(out.astype(jnp.float32), ref, atol=0.15, rtol=0.1), \
        float(jnp.max(jnp.abs(out.astype(jnp.float32) - ref)))

    # structural check at full precision (same kernel, f32 compute / f32 output)
    out32 = downsampling_block(inp, img, w, s1, b1, s2, b2, compute_dtype=jnp.float32)
    out32 = jax.block_until_ready(out32)
    assert jnp.allclose(out32, ref, atol=1e-4, rtol=1e-4), \
        float(jnp.max(jnp.abs(out32 - ref)))

    print("KERNEL_OK")
</pallas_src>

<mosaic_0001>
module attributes {stable_mosaic.version = 11 : i64} {
  func.func @_dsb_kernel(%arg0: i32, %arg1: i32, %arg2: memref<1x72x128xbf16, #tpu.memory_space<vmem>>, %arg3: memref<4x72xbf16, #tpu.memory_space<vmem>>, %arg4: memref<3x8x1xf32, #tpu.memory_space<vmem>>, %arg5: memref<1x8x128xbf16, #tpu.memory_space<vmem>>) attributes {dimension_semantics = [#tpu.dimension_semantics<parallel>, #tpu.dimension_semantics<parallel>], iteration_bounds = array<i64: 2, 1>, scalar_prefetch = 0 : i64, scratch_operands = 0 : i64, tpu.core_type = #tpu.core_type<tc>, window_params = [{transform_indices = @transform_0, window_bounds = array<i64: 1, 72, 128>}, {pipeline_mode = #tpu.pipeline_mode<synchronous>, transform_indices = @transform_1, window_bounds = array<i64: 4, 72>}, {pipeline_mode = #tpu.pipeline_mode<synchronous>, transform_indices = @transform_2, window_bounds = array<i64: 3, 8, 1>}, {transform_indices = @transform_3, window_bounds = array<i64: 1, 8, 128>}]} {
    %c0 = arith.constant 0 : index
    %c0_0 = arith.constant 0 : index
    %c0_1 = arith.constant 0 : index
    %0 = vector.load %arg2[%c0, %c0_0, %c0_1] : memref<1x72x128xbf16, #tpu.memory_space<vmem>>, vector<1x72x128xbf16>
    %1 = vector.shape_cast %0 : vector<1x72x128xbf16> to vector<72x128xbf16>
    %c0_2 = arith.constant 0 : index
    %c0_3 = arith.constant 0 : index
    %2 = vector.load %arg3[%c0_2, %c0_3] : memref<4x72xbf16, #tpu.memory_space<vmem>>, vector<4x72xbf16>
    %cst = arith.constant dense<0.000000e+00> : vector<4x128xf32>
    %3 = tpu.matmul %2, %1, %cst {dimension_numbers = #tpu.dot_dimension_numbers<[1], [0], [0], [1], [0, 0, 1, 1], [], []>} : vector<4x72xbf16>, vector<72x128xbf16>, vector<4x128xf32> -> vector<4x128xf32>
    %c0_4 = arith.constant 0 : index
    %c0_5 = arith.constant 0 : index
    %c0_6 = arith.constant 0 : index
    %4 = vector.load %arg4[%c0_4, %c0_5, %c0_6] : memref<3x8x1xf32, #tpu.memory_space<vmem>>, vector<1x4x1xf32>
    %5 = vector.shape_cast %4 : vector<1x4x1xf32> to vector<4x1xf32>
    %6 = vector.broadcast %5 : vector<4x1xf32> to vector<4x128xf32>
    %7 = arith.addf %3, %6 : vector<4x128xf32>
    %cst_7 = arith.constant 5.000000e-01 : f32
    %8 = vector.broadcast %cst_7 : f32 to vector<4x128xf32>
    %9 = arith.mulf %8, %7 : vector<4x128xf32>
    %cst_8 = arith.constant 0.707106769 : f32
    %10 = vector.broadcast %cst_8 : f32 to vector<4x128xf32>
    %11 = arith.mulf %7, %10 : vector<4x128xf32>
    %12 = math.erf %11 : vector<4x128xf32>
    %cst_9 = arith.constant 1.000000e+00 : f32
    %13 = vector.broadcast %cst_9 : f32 to vector<4x128xf32>
    %14 = arith.addf %13, %12 : vector<4x128xf32>
    %15 = arith.mulf %9, %14 : vector<4x128xf32>
    %16 = vector.extract_strided_slice %1 {offsets = [0, 0], sizes = [4, 128], strides = [1, 1]} : vector<72x128xbf16> to vector<4x128xbf16>
    %17 = arith.extf %16 : vector<4x128xbf16> to vector<4x128xf32>
    %18 = vector.extract_strided_slice %1 {offsets = [8, 0], sizes = [4, 128], strides = [1, 1]} : vector<72x128xbf16> to vector<4x128xbf16>
    %19 = arith.extf %18 : vector<4x128xbf16> to vector<4x128xf32>
    %20 = vector.extract_strided_slice %1 {offsets = [16, 0], sizes = [4, 128], strides = [1, 1]} : vector<72x128xbf16> to vector<4x128xbf16>
    %21 = arith.extf %20 : vector<4x128xbf16> to vector<4x128xf32>
    %22 = vector.extract_strided_slice %1 {offsets = [24, 0], sizes = [4, 128], strides = [1, 1]} : vector<72x128xbf16> to vector<4x128xbf16>
    %23 = arith.extf %22 : vector<4x128xbf16> to vector<4x128xf32>
    %24 = arith.maximumf %17, %19 : vector<4x128xf32>
    %25 = arith.maximumf %21, %23 : vector<4x128xf32>
    %26 = arith.maximumf %24, %25 : vector<4x128xf32>
    %27 = arith.addf %17, %19 : vector<4x128xf32>
    %28 = arith.addf %27, %21 : vector<4x128xf32>
    %29 = arith.addf %28, %23 : vector<4x128xf32>
    %cst_10 = arith.constant 2.500000e-01 : f32
    %30 = vector.broadcast %cst_10 : f32 to vector<4x128xf32>
    %31 = arith.mulf %29, %30 : vector<4x128xf32>
    %32 = arith.addf %26, %31 : vector<4x128xf32>
    %33 = tpu.concatenate %15, %32 in 0 : vector<4x128xf32>, vector<4x128xf32> -> vector<8x128xf32>
    %c1 = arith.constant 1 : index
    %c0_11 = arith.constant 0 : index
    %c0_12 = arith.constant 0 : index
    %34 = vector.load %arg4[%c1, %c0_11, %c0_12] : memref<3x8x1xf32, #tpu.memory_space<vmem>>, vector<1x8x1xf32>
    %35 = vector.shape_cast %34 : vector<1x8x1xf32> to vector<8x1xf32>
    %36 = vector.broadcast %35 : vector<8x1xf32> to vector<8x128xf32>
    %37 = arith.mulf %33, %36 : vector<8x128xf32>
    %c2 = arith.constant 2 : index
    %c0_13 = arith.constant 0 : index
    %c0_14 = arith.constant 0 : index
    %38 = vector.load %arg4[%c2, %c0_13, %c0_14] : memref<3x8x1xf32, #tpu.memory_space<vmem>>, vector<1x8x1xf32>
    %39 = vector.shape_cast %38 : vector<1x8x1xf32> to vector<8x1xf32>
    %40 = vector.broadcast %39 : vector<8x1xf32> to vector<8x128xf32>
    %41 = arith.addf %37, %40 : vector<8x128xf32>
    %cst_15 = arith.constant 5.000000e-01 : f32
    %42 = vector.broadcast %cst_15 : f32 to vector<8x128xf32>
    %43 = arith.mulf %42, %41 : vector<8x128xf32>
    %cst_16 = arith.constant 0.707106769 : f32
    %44 = vector.broadcast %cst_16 : f32 to vector<8x128xf32>
    %45 = arith.mulf %41, %44 : vector<8x128xf32>
    %46 = math.erf %45 : vector<8x128xf32>
    %cst_17 = arith.constant 1.000000e+00 : f32
    %47 = vector.broadcast %cst_17 : f32 to vector<8x128xf32>
    %48 = arith.addf %47, %46 : vector<8x128xf32>
    %49 = arith.mulf %43, %48 : vector<8x128xf32>
    %50 = arith.truncf %49 : vector<8x128xf32> to vector<8x128xbf16>
    %c0_18 = arith.constant 0 : index
    %c0_19 = arith.constant 0 : index
    %c0_20 = arith.constant 0 : index
    %51 = vector.load %arg5[%c0_18, %c0_19, %c0_20] : memref<1x8x128xbf16, #tpu.memory_space<vmem>>, vector<1x8x128xbf16>
    %52 = vector.shape_cast %51 : vector<1x8x128xbf16> to vector<8x128xbf16>
    %53 = vector.shape_cast %50 : vector<8x128xbf16> to vector<1x8x128xbf16>
    tpu.vector_store %arg5[%c0_18, %c0_19, %c0_20], %53 {strides = array<i32>} : memref<1x8x128xbf16, #tpu.memory_space<vmem>>, vector<1x8x128xbf16>,
    return
  }
  func.func @transform_0(%arg0: i32, %arg1: i32) -> (i32, i32, i32) {
    %c0_i32 = arith.constant 0 : i32
    %c0_i32_0 = arith.constant 0 : i32
    return %arg0, %c0_i32, %arg1 : i32, i32, i32
  }
  func.func @transform_1(%arg0: i32, %arg1: i32) -> (i32, i32) {
    %c0_i32 = arith.constant 0 : i32
    %c0_i32_0 = arith.constant 0 : i32
    %c0_i32_1 = arith.constant 0 : i32
    return %c0_i32, %c0_i32_0 : i32, i32
  }
  func.func @transform_2(%arg0: i32, %arg1: i32) -> (i32, i32, i32) {
    %c0_i32 = arith.constant 0 : i32
    %c0_i32_0 = arith.constant 0 : i32
    %c0_i32_1 = arith.constant 0 : i32
    %c0_i32_2 = arith.constant 0 : i32
    return %c0_i32, %c0_i32_0, %c0_i32_1 : i32, i32, i32
  }
  func.func @transform_3(%arg0: i32, %arg1: i32) -> (i32, i32, i32) {
    %c0_i32 = arith.constant 0 : i32
    %c0_i32_0 = arith.constant 0 : i32
    return %arg0, %c0_i32, %arg1 : i32, i32, i32
  }
}

</mosaic_0001>

<llo_original>
// kernel: tpu_custom_call.1
$region0: #{tpu_custom_call.1}
  #allocation0 [shape = 'u32[]', space=smem, size = 0x4, offset = 0x4, fixed_abs, tag = 'smem constant byte address 0x4 - core index']
  #allocation1 [shape = 'u32[72,128]{1,0:T(1,128)}', space=vmem, size = 0x9000, scoped, tag = 'internal scratch']
  %s0 = inlined_call_operand.hbm [shape: bf16[2,72,128], index: 0, kind: input, shape index: {}]
  %s1 = inlined_call_operand.vmem [shape: bf16[4,72], index: 1, kind: input, shape index: {}]
  %s2 = inlined_call_operand.vmem [shape: f32[3,8,1], index: 2, kind: input, shape index: {}]
  %s3 = inlined_call_operand.hbm [shape: bf16[2,8,128], index: 3, kind: output, shape index: {}]
  %s4 = sld [smem:[#allocation0]]
  $region49: #{tpu_custom_call.1} parent=0
    _
  %s6 = ssub.s32 1, %s4
  %s7 = scalar_select 0, %s6, %s4
  $region1: #{tpu_custom_call.1} parent=0
    #allocation2 [shape = 'u8[36864]{0}', space=vmem, size = 0x9000, scoped, tag = 'input window, operand 0']
    #allocation3 [shape = 's32[2]{0}', space=sflag, size = 0x8, scoped, tag = 'scoped memory for tpu_custom_call.1']
    #allocation4 [shape = 's32[2]{0}', space=sflag, size = 0x8, scoped, tag = 'scoped memory for tpu_custom_call.1']
    #allocation5 [shape = 'u8[4096]{0}', space=vmem, size = 0x1000, scoped, tag = 'output window, operand 0']
    %8 = vsyncpa [#allocation3], 0
    %s9 = scalar_lea.sflag [#allocation3], 1
    %10 = vsyncpa %s9, 0
    %11 = vsyncpa [#allocation4], 0
    %s12 = scalar_lea.sflag [#allocation4], 1
    %13 = vsyncpa %s12, 0
    loop: start=0, step=1, limit=4
    $region2: #{tpu_custom_call.1} parent=1 // loop_pre_header
      _
    $region3: #{tpu_custom_call.1} parent=1 // loop_header
      %s15 = sphi 0, %s19
      %p16 = scmp.ge.s32.totalorder %s15, 4
      %s22 = sphi 0, %s34
      %s23 = sphi 0, %s30
      %s24 = sphi 0, %s22
      %s25 = sphi 0, %s23
      %s26 = sphi 0, %s24
      %s27 = sphi 0, %s25
      %s39 = sphi 0, %s41
      %s42 = sphi 0, %s39
      %s43 = sphi 0, %s42
      %s59 = sphi 0, %s43
      %s63 = sphi 0, %s63
      %s65 = sphi 0, %s63
      %s66 = sphi 0, %s65
      %s80 = sphi 0, %s66
      %s84 = sphi 0, %s84
      %s86 = sphi 0, %s84
      %s87 = sphi 0, %s86
      %s101 = sphi 0, %s87
      %s109 = sphi 0, %s111
      %s112 = sphi 0, %s109
      %s113 = sphi 0, %s112
      %s129 = sphi 0, %s113
    $region4: #{tpu_custom_call.1} parent=1 // loop_header_branch
      %18 = sbr.rel (%p16) target = $region8
    $region5: #{tpu_custom_call.1} parent=1 // loop_body
      %s20 = ssub.s32 %s15, 1
      %s21 = ssub.s32 %s15, 2
      %s28 = sadd.s32 1, %s23
      %p29 = scmp.ge.s32.totalorder %s28, 1
      %s30 = scalar_select %p29, 0, %s28
      %s31 = sadd.s32 1, %s22
      %s32 = scalar_select %p29, %s31, %s22
      %p33 = scmp.ge.s32.totalorder %s32, 2
      %s34 = scalar_select %p33, 0, %s32
      %s35 = ssub.s32 %s22, %s34
      %s36 = ssub.s32 %s23, %s30
      %s37 = sor.u32 %s35, %s36
      %p38 = scmp.eq.s32.totalorder %s37, 0
      %s40 = sadd.s32 %s39, 1
      %s41 = scalar_select %p38, %s39, %s40
      %p44 = pneg %p38
      %p45 = scmp.eq.s32.totalorder %s15, 1
      %p46 = por %p44, %p45
      %p47 = scmp.ne.s32.totalorder %s39, %s42
      %p48 = scmp.eq.s32.totalorder %s15, 0
      %p49 = por %p47, %p48
      %p50 = scmp.ne.s32.totalorder %s39, %s42
      %p51 = scmp.eq.s32.totalorder %s20, 1
      %p52 = por %p50, %p51
      %p53 = scmp.ne.s32.totalorder %s42, %s43
      %p54 = scmp.eq.s32.totalorder %s20, 0
      %p55 = por %p53, %p54
      %p56 = scmp.ne.s32.totalorder %s42, %s43
      %p57 = scmp.eq.s32.totalorder %s21, 1
      %p58 = por %p56, %p57
      %p60 = scmp.ne.s32.totalorder %s43, %s59
      %p61 = scmp.eq.s32.totalorder %s21, 0
      %p62 = por %p60, %p61
      %s64 = sadd.s32 %s63, 1
      %p67 = scmp.eq.s32.totalorder %s15, 1
      %p68 = scmp.ne.s32.totalorder %s63, %s65
      %p69 = scmp.eq.s32.totalorder %s15, 0
      %p70 = por %p68, %p69
      %p71 = scmp.ne.s32.totalorder %s63, %s65
      %p72 = scmp.eq.s32.totalorder %s20, 1
      %p73 = por %p71, %p72
      %p74 = scmp.ne.s32.totalorder %s65, %s66
      %p75 = scmp.eq.s32.totalorder %s20, 0
      %p76 = por %p74, %p75
      %p77 = scmp.ne.s32.totalorder %s65, %s66
      %p78 = scmp.eq.s32.totalorder %s21, 1
      %p79 = por %p77, %p78
      %p81 = scmp.ne.s32.totalorder %s66, %s80
      %p82 = scmp.eq.s32.totalorder %s21, 0
      %p83 = por %p81, %p82
      %s85 = sadd.s32 %s84, 1
      %p88 = scmp.eq.s32.totalorder %s15, 1
      %p89 = scmp.ne.s32.totalorder %s84, %s86
      %p90 = scmp.eq.s32.totalorder %s15, 0
      %p91 = por %p89, %p90
      %p92 = scmp.ne.s32.totalorder %s84, %s86
      %p93 = scmp.eq.s32.totalorder %s20, 1
      %p94 = por %p92, %p93
      %p95 = scmp.ne.s32.totalorder %s86, %s87
      %p96 = scmp.eq.s32.totalorder %s20, 0
      %p97 = por %p95, %p96
      %p98 = scmp.ne.s32.totalorder %s86, %s87
      %p99 = scmp.eq.s32.totalorder %s21, 1
      %p100 = por %p98, %p99
      %p102 = scmp.ne.s32.totalorder %s87, %s101
      %p103 = scmp.eq.s32.totalorder %s21, 0
      %p104 = por %p102, %p103
      %s105 = ssub.s32 %s22, %s34
      %s106 = ssub.s32 %s23, %s30
      %s107 = sor.u32 %s105, %s106
      %p108 = scmp.eq.s32.totalorder %s107, 0
      %s110 = sadd.s32 %s109, 1
      %s111 = scalar_select %p108, %s109, %s110
      %p114 = pneg %p108
      %p115 = scmp.eq.s32.totalorder %s15, 1
      %p116 = por %p114, %p115
      %p117 = scmp.ne.s32.totalorder %s109, %s112
      %p118 = scmp.eq.s32.totalorder %s15, 0
      %p119 = por %p117, %p118
      %p120 = scmp.ne.s32.totalorder %s109, %s112
      %p121 = scmp.eq.s32.totalorder %s20, 1
      %p122 = por %p120, %p121
      %p123 = scmp.ne.s32.totalorder %s112, %s113
      %p124 = scmp.eq.s32.totalorder %s20, 0
      %p125 = por %p123, %p124
      %p126 = scmp.ne.s32.totalorder %s112, %s113
      %p127 = scmp.eq.s32.totalorder %s21, 1
      %p128 = por %p126, %p127
      %p130 = scmp.ne.s32.totalorder %s113, %s129
      %p131 = scmp.eq.s32.totalorder %s21, 0
      %p132 = por %p130, %p131
      %p133 = scmp.le.s32.totalorder 1, %s15
      %p134 = scmp.lt.s32.totalorder %s15, 3
      %p135 = pnand %p133, %p134
      %p136 = pneg %p135
      // Predicated region
      $region9: #{tpu_custom_call.1} parent=5 // pred_check
        _
      $region10: #{tpu_custom_call.1} parent=5 // pred_check_branch
        %138 = sbr.rel (%p135) target = $region12
      $region11: #{tpu_custom_call.1} parent=5 // pred_region
        %s139 = ssub.s32 %s15, 1
        // Predicated region
        $region13: #{tpu_custom_call.1} parent=11 // pred_check
          %p140 = pneg %p76
        $region14: #{tpu_custom_call.1} parent=11 // pred_check_branch
          %142 = sbr.rel (%p140) target = $region16
        $region15: #{tpu_custom_call.1} parent=11 // pred_region
          _
        $region16: #{tpu_custom_call.1} parent=11 // pred_fallthru
          _
        // Predicated region
        $region17: #{tpu_custom_call.1} parent=11 // pred_check
          %p143 = pneg %p97
        $region18: #{tpu_custom_call.1} parent=11 // pred_check_branch
          %145 = sbr.rel (%p143) target = $region20
        $region19: #{tpu_custom_call.1} parent=11 // pred_region
          _
        $region20: #{tpu_custom_call.1} parent=11 // pred_fallthru
          _
      $region12: #{tpu_custom_call.1} parent=5 // pred_fallthru
        _
      %p146 = scmp.lt.s32.totalorder %s15, 2
      // Predicated region
      $region21: #{tpu_custom_call.1} parent=5 // pred_check
        %p147 = pneg %p146
      $region22: #{tpu_custom_call.1} parent=5 // pred_check_branch
        %149 = sbr.rel (%p147) target = $region24
      $region23: #{tpu_custom_call.1} parent=5 // pred_region
        // Predicated region
        $region25: #{tpu_custom_call.1} parent=23 // pred_check
          %p150 = pneg %p49
        $region26: #{tpu_custom_call.1} parent=23 // pred_check_branch
          %152 = sbr.rel (%p150) target = $region28
        $region27: #{tpu_custom_call.1} parent=23 // pred_region
          %s153 = sand.u32 %s39, 1
          %s154 = scalar_lea.sflag [#allocation3], %s153
          %s155 = sand.u32 %s39, 1
          %s156 = smul.addr %s155, 36
          %s157 = scalar_lea.vmem [#allocation2], %s156
          %159 = vsyncadd %s154, 0
          %s160 = smul.addr %s22, 9
          %s161 = sadd.s32 %s23, %s160
          %s162 = smul.addr %s161, 4
          %s163 = scalar_lea.hbm %s0, %s162
          %s164 = sshll.u32 %s163, 4
          %s165 = int_to_ptr.hbm [resolvable:$true] %s164
          %s166 = sshll.u32 %s157, 4
          %s167 = int_to_ptr.vmem [resolvable:$true] %s166
          %172 = dma.hbm_to_vmem [thread:$0]  %s165, 576, %s167, %s154, 64, 64, 4
        $region28: #{tpu_custom_call.1} parent=23 // pred_fallthru
          _
      $region24: #{tpu_custom_call.1} parent=5 // pred_fallthru
        _
      %p173 = scmp.le.s32.totalorder 1, %s15
      %p174 = scmp.lt.s32.totalorder %s15, 3
      %p175 = pnand %p173, %p174
      %p176 = pneg %p175
      // Predicated region
      $region29: #{tpu_custom_call.1} parent=5 // pred_check
        _
      $region30: #{tpu_custom_call.1} parent=5 // pred_check_branch
        %178 = sbr.rel (%p175) target = $region32
      $region31: #{tpu_custom_call.1} parent=5 // pred_region
        %s179 = ssub.s32 %s15, 1
        %s180 = sand.u32 %s42, 1
        %s181 = scalar_lea.sflag [#allocation3], %s180
        %s182 = sand.u32 %s42, 1
        %s183 = smul.addr %s182, 36
        %s184 = scalar_lea.vmem [#allocation2], %s183
        // Predicated region
        $region33: #{tpu_custom_call.1} parent=31 // pred_check
          %p185 = pneg %p55
        $region34: #{tpu_custom_call.1} parent=31 // pred_check_branch
          %187 = sbr.rel (%p185) target = $region36
        $region35: #{tpu_custom_call.1} parent=31 // pred_region
          %189 = dma.done %s181, 576
        $region36: #{tpu_custom_call.1} parent=31 // pred_fallthru
          _
        %s190 = sand.u32 %s42, 1
        %s191 = scalar_lea.sflag [#allocation3], %s190
        %s192 = sand.u32 %s42, 1
        %s193 = smul.addr %s192, 36
        %s194 = scalar_lea.vmem [#allocation2], %s193
        %p195 = pneg %p55
        %p196 = pneg %p52
        %p197 = pneg %p76
        %p198 = pneg %p73
        %p199 = pneg %p97
        %p200 = pneg %p94
        %p201 = pneg %p125
        %p202 = pneg %p122
        %s203 = sand.u32 %s112, 1
        %s204 = scalar_lea.sflag [#allocation4], %s203
        %s205 = sand.u32 %s112, 1
        %s206 = smul.addr %s205, 4
        %s207 = scalar_lea.vmem [#allocation5], %s206
        %v209 = vld [vmem:[%s184] sm:$0xf]
        %v210 = vld [vmem:[%s184 + $0x4] sm:$0xf]
        %v211 = vld [vmem:[%s184 + $0x8] sm:$0xf]
        %v212 = vld [vmem:[%s184 + $0xc] sm:$0xf]
        %v213 = vld [vmem:[%s184 + $0x10] sm:$0xf]
        %v214 = vld [vmem:[%s184 + $0x14] sm:$0xf]
        %v215 = vld [vmem:[%s184 + $0x18] sm:$0xf]
        %v216 = vld [vmem:[%s184 + $0x1c] sm:$0xf]
        %v217 = vld [vmem:[%s184 + $0x20] sm:$0xf]
        %v218 = vld [vmem:[%s1] sm:$0x3]
        %v219 = vld [vmem:[%s2] sm:$0xf]
        %221 = vset.pattern.permute.xlu0 0
        %222 = vperm.xlu0 %221, %v219
        %v223 = vpop.permute.xlu0 %222
        %v234 = vunpack.c.l.b16 %v209
        %v235 = vunpack.c.l.b16 %v210
        %v236 = vunpack.c.l.b16 %v211
        %v237 = vunpack.c.l.b16 %v212
        %v238 = vunpack.c.l.b16 %v213
        %v239 = vunpack.c.l.b16 %v214
        %v240 = vunpack.c.l.b16 %v215
        %v241 = vunpack.c.l.b16 %v216
        %v242 = vunpack.c.l.b16 %v217
        %v243 = vpack.c.b16 %v235, %v234
        %v244 = vpack.c.b16 %v237, %v236
        %v245 = vpack.c.b16 %v239, %v238
        %v246 = vpack.c.b16 %v241, %v240
        %v247 = vpack.c.b16 %v242, %v242
        %vm252 = vcmask 588800
        %v254 = vsel %vm252, %v218, 0
        %vm256 = vcmask 1043456
        %v258 = vsel %vm256, %v247, 0
        %260 = vmatpush.bf16.msra.mxu0 0
        %261 = vmatpush.bf16.msra.mxu0 0
        %262 = vmatpush.bf16.msra.mxu0 0
        %263 = vmatpush.bf16.msra.mxu0 %v258
        %264 = vmatpush.bf16.msra.mxu0 %v246
        %265 = vmatpush.bf16.msra.mxu0 %v245
        %266 = vmatpush.bf16.msra.mxu0 %v244
        %267 = vmatpush.bf16.msra.mxu0 %v243
        %268 = vmatmul.bf16.gmra.mxu0 %v254
        %v269 = vpop.f32.mrf.mxu0
        %v270 = vadd.f32 %v223, %v269
        %v271 = vpop.f32.mrf.mxu0
        %272 = vdwg.mxu0
        %v273 = vmul.f32 %v270, 0.5
        %v274 = vmul.f32 %v270, 0.70710677
        %v275 = vmul.f32 %v274, %v274
        %v276 = vmin.f32 16.0, %v275
        %v277 = vmul.f32 %v276, 2.1237322e-06
        %v278 = vadd.f32 %v277, 0.00028619796
        %v279 = vmul.f32 %v276, %v278
        %v280 = vadd.f32 %v279, 0.0036580483
        %v281 = vmul.f32 %v276, %v280
        %v282 = vadd.f32 %v281, 0.05243302
        %v283 = vmul.f32 %v276, %v282
        %v284 = vadd.f32 %v283, 0.18741608
        %v285 = vmul.f32 %v276, %v284
        %v286 = vadd.f32 %v285, 1.1283791
        %v287 = vmul.f32 %v274, %v286
        %v288 = vmul.f32 %v276, 3.8918573e-05
        %v289 = vadd.f32 %v288, 0.001143296
        %v290 = vmul.f32 %v276, %v289
        %v291 = vadd.f32 %v290, 0.014752088
        %v292 = vmul.f32 %v276, %v291
        %v293 = vadd.f32 %v292, 0.112945676
        %v294 = vmul.f32 %v276, %v293
        %v295 = vadd.f32 %v294, 0.4994258
        %v296 = vmul.f32 %v276, %v295
        %v297 = vadd.f32 %v296, 1.0
        %v298 = vrcp.pop %v297
        %v299 = vmul.f32 %v297, %v298
        %v300 = vsub.f32 1.0, %v299
        %v301 = vmul.f32 %v298, %v300
        %v302 = vadd.f32 %v298, %v301
        %vm303 = vweird.f32 %v297
        %vm304 = vweird.f32 %v298
        %vm305 = vmor %vm303, %vm304
        %v306 = vsel %vm305, %v298, %v302
        %v307 = vand.u32 2147483647, %v297
        %vm308 = vcmp.eq.f32.partialorder %v307, 8.507059e+37
        %v309 = vand.u32 %v297, 2147483648
        %v310 = vor.u32 1.1754944e-38, %v309
        %v311 = vsel %vm308, %v310, %v306
        %v312 = vmul.f32 %v287, %v311
        %v313 = vmin.f32 %v312, 1.0
        %v314 = vmax.f32 %v313, -1.0
        %v315 = vadd.f32 %v314, 1.0
        %v316 = vmul.f32 %v273, %v315
        %v317 = vunpack.c.l.bf16 %v209
        %v318 = vunpack.c.l.bf16 %v210
        %v319 = vunpack.c.l.bf16 %v211
        %v320 = vunpack.c.l.bf16 %v212
        %v321 = vmax.f32 %v317, %v318
        %v322 = vmax.f32 %v319, %v320
        %v323 = vmax.f32 %v321, %v322
        %v324 = vadd.f32 %v317, %v318
        %v325 = vadd.f32 %v324, %v319
        %v326 = vadd.f32 %v325, %v320
        %v327 = vmul.f32 %v326, 0.25
        %v328 = vadd.f32 %v323, %v327
        %v330 = vrot.slane %v328, 4
        %v332 = vsel %vm256, %v316, %v330
        %s333 = scalar_lea.vmem %s2, 8
        %v334 = vld [vmem:[%s333] sm:$0xff]
        %336 = vset.pattern.permute.xlu0 0
        %337 = vperm.xlu0 %336, %v334
        %v338 = vpop.permute.xlu0 %337
        %v340 = vmul.f32 %v332, %v338
        %s341 = scalar_lea.vmem %s2, 16
        %v342 = vld [vmem:[%s341] sm:$0xff]
        %344 = vset.pattern.permute.xlu0 0
        %345 = vperm.xlu0 %344, %v342
        %v346 = vpop.permute.xlu0 %345
        %v348 = vadd.f32 %v340, %v346
        %v349 = vmul.f32 %v348, 0.5
        %v350 = vmul.f32 %v348, 0.70710677
        %v351 = vmul.f32 %v350, %v350
        %v352 = vmin.f32 16.0, %v351
        %v353 = vmul.f32 %v352, 2.1237322e-06
        %v354 = vadd.f32 %v353, 0.00028619796
        %v355 = vmul.f32 %v352, %v354
        %v356 = vadd.f32 %v355, 0.0036580483
        %v357 = vmul.f32 %v352, %v356
        %v358 = vadd.f32 %v357, 0.05243302
        %v359 = vmul.f32 %v352, %v358
        %v360 = vadd.f32 %v359, 0.18741608
        %v361 = vmul.f32 %v352, %v360
        %v362 = vadd.f32 %v361, 1.1283791
        %v363 = vmul.f32 %v350, %v362
        %v364 = vmul.f32 %v352, 3.8918573e-05
        %v365 = vadd.f32 %v364, 0.001143296
        %v366 = vmul.f32 %v352, %v365
        %v367 = vadd.f32 %v366, 0.014752088
        %v368 = vmul.f32 %v352, %v367
        %v369 = vadd.f32 %v368, 0.112945676
        %v370 = vmul.f32 %v352, %v369
        %v371 = vadd.f32 %v370, 0.4994258
        %v372 = vmul.f32 %v352, %v371
        %v373 = vadd.f32 %v372, 1.0
        %v374 = vrcp.pop %v373
        %v375 = vmul.f32 %v373, %v374
        %v376 = vsub.f32 1.0, %v375
        %v377 = vmul.f32 %v374, %v376
        %v378 = vadd.f32 %v374, %v377
        %vm379 = vweird.f32 %v373
        %vm380 = vweird.f32 %v374
        %vm381 = vmor %vm379, %vm380
        %v382 = vsel %vm381, %v374, %v378
        %v383 = vand.u32 2147483647, %v373
        %vm384 = vcmp.eq.f32.partialorder %v383, 8.507059e+37
        %v385 = vand.u32 %v373, 2147483648
        %v386 = vor.u32 1.1754944e-38, %v385
        %v387 = vsel %vm384, %v386, %v382
        %v388 = vmul.f32 %v363, %v387
        %v389 = vmin.f32 %v388, 1.0
        %v390 = vmax.f32 %v389, -1.0
        %v391 = vadd.f32 %v390, 1.0
        %v392 = vmul.f32 %v349, %v391
        %v393 = vpack.c.bf16 %v392, %v392
        %394 = vst [vmem:[%s207] sm:$0xf] %v393
        %s395 = sand.u32 %s112, 1
        %s396 = scalar_lea.sflag [#allocation4], %s395
        %s397 = sand.u32 %s112, 1
        %s398 = smul.addr %s397, 4
        %s399 = scalar_lea.vmem [#allocation5], %s398
        // Predicated region
        $region37: #{tpu_custom_call.1} parent=31 // pred_check
          %p400 = pneg %p122
        $region38: #{tpu_custom_call.1} parent=31 // pred_check_branch
          %402 = sbr.rel (%p400) target = $region40
        $region39: #{tpu_custom_call.1} parent=31 // pred_region
          %404 = vsyncadd %s396, 0
          %s405 = sadd.s32 %s25, %s24
          %s406 = smul.addr %s405, 4
          %s407 = scalar_lea.hbm %s3, %s406
          %s409 = sshll.u32 %s399, 4
          %s410 = int_to_ptr.vmem [resolvable:$true] %s409
          %s411 = sshll.u32 %s407, 4
          %s412 = int_to_ptr.hbm [resolvable:$true] %s411
          %414 = dma.vmem_to_hbm [thread:$0]  %s410, 64, %s412, %s396
        $region40: #{tpu_custom_call.1} parent=31 // pred_fallthru
          _
      $region32: #{tpu_custom_call.1} parent=5 // pred_fallthru
        _
      %p415 = scmp.le.s32.totalorder 2, %s15
      // Predicated region
      $region41: #{tpu_custom_call.1} parent=5 // pred_check
        %p416 = pneg %p415
      $region42: #{tpu_custom_call.1} parent=5 // pred_check_branch
        %418 = sbr.rel (%p416) target = $region44
      $region43: #{tpu_custom_call.1} parent=5 // pred_region
        %s419 = ssub.s32 %s15, 2
        // Predicated region
        $region45: #{tpu_custom_call.1} parent=43 // pred_check
          %p420 = pneg %p128
        $region46: #{tpu_custom_call.1} parent=43 // pred_check_branch
          %422 = sbr.rel (%p420) target = $region48
        $region47: #{tpu_custom_call.1} parent=43 // pred_region
          %s423 = sand.u32 %s113, 1
          %s424 = scalar_lea.sflag [#allocation4], %s423
          %s425 = sand.u32 %s113, 1
          %s426 = smul.addr %s425, 4
          %s427 = scalar_lea.vmem [#allocation5], %s426
          %429 = dma.done %s424, 64
        $region48: #{tpu_custom_call.1} parent=43 // pred_fallthru
          _
      $region44: #{tpu_custom_call.1} parent=5 // pred_fallthru
        _
    $region6: #{tpu_custom_call.1} parent=1 // loop_footer
      %s19 = sadd.s32 1, %s15
    $region7: #{tpu_custom_call.1} parent=1 // loop_footer_branch
      %14 = sbr.rel target = $region3
    $region8: #{tpu_custom_call.1} parent=1 // loop_exit
      _
    %430 = vsyncpa [#allocation3], 1
    %s431 = scalar_lea.sflag [#allocation3], 1
    %432 = vsyncpa %s431, 1
    %433 = vsyncpa [#allocation4], 1
    %s434 = scalar_lea.sflag [#allocation4], 1
    %435 = vsyncpa %s434, 1

</llo_original>
